<compile_context>
chip_gen: v7x
topology: tpu7x:2x2x1
jax: 0.10.0
libtpu: 0.0.40
codegen_flags: <defaults>
</compile_context>

<pallas_src>
import jax
import jax.numpy as jnp
from jax.experimental import pallas as pl
from jax.experimental.pallas import tpu as pltpu  # noqa: F401  (TPU backend)

FF_DIM = 32            # ff_dim
ACT_FEATURES = 32      # ControlsPredictorDot `features`
N_ACTIONS = 16         # rows of the (synthetic) action lookup table
N_OTHER = 2            # real "other agents" encoded in the input
INPUT_DIM = 76 + 31 * N_OTHER
BATCH = 4

LANES = 128
N_AGENT_SLOTS = 8      # agents padded 5 -> 8: one sublane tile per batch
OA_FEATS = 62          # 32 + 30
BBA_FEATS = 76

# ----------------------------------------------------------------------------
# Parameter-slab layout (rows of a (W_SLAB_ROWS, FF_DIM) f32 slab).
# All offsets are multiples of 8 -> sublane-aligned static slices in-kernel.
# ----------------------------------------------------------------------------
_W_LAYOUT = [
    ("wb0", 128), ("wb1", FF_DIM), ("wb2", FF_DIM),      # pre_bba (76->128 pad)
    ("wo0", 128), ("wo1", FF_DIM), ("wo2", FF_DIM),      # pre_oa  (62->128 pad)
    ("wh0", 4 * FF_DIM), ("wh1", FF_DIM),                # hidden
    ("wfold", FF_DIM),                                   # emb_convertor @ act_emb.T
]
W_OFFSETS = {}
_r = 0
for _name, _rows in _W_LAYOUT:
    W_OFFSETS[_name] = (_r, _r + _rows)
    _r += _rows
BIAS_ROW0 = _r                     # 576
N_BIAS = 9                         # bb0..2, bo0..2, bh0..1, bfold
W_SLAB_ROWS = BIAS_ROW0 + 16       # 592 (bias rows padded to a full tile pair)


# ----------------------------------------------------------------------------
# pallas_call plumbing: tiny shapes -> whole arrays as single VMEM blocks,
# no grid (single invocation, nothing to pipeline).
# ----------------------------------------------------------------------------
def _full_spec(shape):
    nd = len(shape)
    return pl.BlockSpec(shape, lambda *_: (0,) * nd)


def _call(kernel, out_shape, *args):
    return pl.pallas_call(
        kernel,
        in_specs=[_full_spec(a.shape) for a in args],
        out_specs=_full_spec(out_shape.shape),
        out_shape=out_shape,
    )(*args)


# ----------------------------------------------------------------------------
# Kernels
# ----------------------------------------------------------------------------
def _act_net_kernel(a_ref, w0, b0, w1, b1, w2, b2, o_ref):
    # ControlsPredictorDot.net: Linear->ReLU->Linear->ReLU->Linear.
    # Input-independent (actions are a parameter) -> run ONCE at init.
    h = jnp.maximum(jnp.dot(a_ref[...], w0[...],
                            preferred_element_type=jnp.float32) + b0[...], 0.0)
    h = jnp.maximum(jnp.dot(h, w1[...],
                            preferred_element_type=jnp.float32) + b1[...], 0.0)
    o_ref[...] = jnp.dot(h, w2[...],
                         preferred_element_type=jnp.float32) + b2[...]


def _fused_forward_kernel(x_ref, w_ref, o_ref):
    # x_ref: (72, 128) activation slab
    #   rows [0, 8B)        other-agent features in lanes 0:62 (rest zero)
    #   rows [8B, 16B)      pad-mask broadcast to lanes 0:FF (1.0 == padded)
    #   rows [16B, 16B+B)   bba features in lanes 0:76 (rest zero)
    # w_ref: (592, 32) parameter slab (see _W_LAYOUT / BIAS_ROW0)
    # o_ref: (B, N_ACTIONS) logits
    f32 = jnp.float32
    B = o_ref.shape[0]
    nA = N_AGENT_SLOTS
    FF = FF_DIM
    inf = f32(jnp.inf)

    def relu(v):
        return jnp.maximum(v, 0.0)

    def w(name):
        lo, hi = W_OFFSETS[name]
        return w_ref[lo:hi, :]

    def bias(k):
        return w_ref[BIAS_ROW0 + k:BIAS_ROW0 + k + 1, :]    # (1, FF) row

    # --- pre_oa MLP on the flattened, 8-padded agent stream ------------------
    # (8B, 128) @ (128, FF): lanes 62:128 of oa rows are zero and so are the
    # corresponding weight rows, so no in-kernel lane slicing is needed.
    oa = x_ref[0:nA * B, :]
    h = relu(jnp.dot(oa, w("wo0"), preferred_element_type=f32) + bias(3))
    h = relu(jnp.dot(h,  w("wo1"), preferred_element_type=f32) + bias(4))
    h = relu(jnp.dot(h,  w("wo2"), preferred_element_type=f32) + bias(5))

    # --- pre_bba MLP: (B, 128) -> (B, FF) ------------------------------------
    xb = x_ref[2 * nA * B:2 * nA * B + B, :]
    xb = relu(jnp.dot(xb, w("wb0"), preferred_element_type=f32) + bias(0))
    xb = relu(jnp.dot(xb, w("wb1"), preferred_element_type=f32) + bias(1))
    xb = relu(jnp.dot(xb, w("wb2"), preferred_element_type=f32) + bias(2))

    # --- masked combined_pool (min | max | mean), vectorized over axis=1 -----
    m = x_ref[nA * B:2 * nA * B, 0:FF]           # (8B, FF), 1.0 == padded agent
    h3 = h.reshape(B, nA, FF)
    m3 = m.reshape(B, nA, FF)
    pad3 = m3 > 0.5
    valid3 = 1.0 - m3
    mn = jnp.min(jnp.where(pad3, inf, h3), axis=1)            # (B, FF)
    mx = jnp.max(jnp.where(pad3, -inf, h3), axis=1)           # (B, FF)
    cnt = jnp.maximum(jnp.sum(valid3, axis=1), 1.0)           # guard all-padded
    me = jnp.sum(h3 * valid3, axis=1) / cnt                   # (B, FF)

    # --- lane-dense hidden slab (B, 4*FF == 128) + hidden MLP ----------------
    x = jnp.concatenate((xb, mn, mx, me), axis=-1)
    x = relu(jnp.dot(x, w("wh0"), preferred_element_type=f32) + bias(6))
    x = relu(jnp.dot(x, w("wh1"), preferred_element_type=f32) + bias(7))

    # --- folded emb_convertor + action dot: x @ (we @ act_emb.T) + be_fold ---
    y = jnp.dot(x, w("wfold"), preferred_element_type=f32) + bias(8)   # (B, FF)
    o_ref[...] = y[:, 0:o_ref.shape[1]]


# ----------------------------------------------------------------------------
# Plain-JAX glue (slicing / trig / cumsum preprocessing) — kept outside the
# kernel; the results are packed into ONE activation slab for the custom call.
# ----------------------------------------------------------------------------
def add_relative_components(bba, oa):
    fwd = bba[..., 60:63][..., None, :]          # (B, 1, 3)
    up = bba[..., 63:66][..., None, :]           # (B, 1, 3)
    left = jnp.cross(up, fwd)
    pitch = jnp.arctan2(fwd[..., 2], jnp.sqrt(fwd[..., 0] ** 2 + fwd[..., 1] ** 2))
    yaw = jnp.arctan2(fwd[..., 1], fwd[..., 0])
    roll = jnp.arctan2(left[..., 2], up[..., 2])
    pitch, yaw, roll = pitch[..., None], yaw[..., None], roll[..., None]
    cr, sr = jnp.cos(roll), jnp.sin(roll)
    cp, sp = jnp.cos(pitch), jnp.sin(pitch)
    cy, sy = jnp.cos(yaw), jnp.sin(yaw)
    vals = jnp.concatenate((oa[..., 1:7], oa[..., 10:16], oa[..., 19:22]), axis=-1)
    xs, ys, zs = vals[..., 0::3], vals[..., 1::3], vals[..., 2::3]
    frx = cy * xs - sy * ys
    fry = sy * xs + cy * ys
    frz = zs
    crx = cp * cy * xs + (sr * sp * cy - cr * sy) * ys - (cr * sp * cy + sr * sy) * zs
    cry = cp * sy * xs + (sr * sp * sy + cr * cy) * ys - (cr * sp * sy - sr * cy) * zs
    crz = sp * xs - cp * sr * ys + cp * cr * zs
    all_rows = jnp.concatenate((frx, fry, frz, crx, cry, crz), axis=-1)
    return jnp.concatenate((oa, all_rows), axis=-1)  # (B, 5, 62)


def preprocess(inp):
    # inp: (B, INPUT_DIM) float32
    bba = inp[..., :76]
    bba = bba.at[:, 9:14].set(0.0)
    oa_flat = inp[..., 76:]
    n = oa_flat.shape[-1] // 31
    oa = oa_flat.reshape(oa_flat.shape[:-1] + (n, 31))
    # F.pad(oa, (1, 0, 0, 5 - n)): prepend one feature, pad agents up to 5.
    oa = jnp.pad(oa, ((0, 0), (0, 5 - n), (1, 0)))
    nonzero = jnp.any(oa != 0, axis=-1)                       # (B, 5)
    nz_cs = jnp.cumsum(nonzero.astype(jnp.int32), axis=-1)
    nz_s = jnp.sum(nonzero.astype(jnp.int32), axis=-1, keepdims=True)
    teammate_mask = nz_cs <= nz_s // 2
    oa = oa.at[..., 0].set(jnp.where(teammate_mask, 1.0, oa[..., 0]))
    oa_aug = add_relative_components(bba, oa)                 # (B, 5, 62)
    return bba, oa_aug, nonzero


def pack_activations(bba, oa_aug, nonzero):
    """One (rows, 128) f32 slab: [oa rows | mask rows | bba rows | zero pad]."""
    B = bba.shape[0]
    nA = N_AGENT_SLOTS
    oa8 = jnp.pad(oa_aug, ((0, 0), (0, nA - oa_aug.shape[1]), (0, 0)))   # (B, 8, 62)
    nz8 = jnp.pad(nonzero, ((0, 0), (0, nA - nonzero.shape[1])))         # (B, 8) bool
    maskf = (~nz8).astype(jnp.float32).reshape(B * nA, 1)                # 1.0 == padded
    oa_rows = jnp.pad(oa8.reshape(B * nA, OA_FEATS),
                      ((0, 0), (0, LANES - OA_FEATS)))
    mask_rows = jnp.pad(jnp.broadcast_to(maskf, (B * nA, FF_DIM)),
                        ((0, 0), (0, LANES - FF_DIM)))
    bba_rows = jnp.pad(bba, ((0, 0), (0, LANES - BBA_FEATS)))
    rows = 2 * nA * B + B
    tail = jnp.zeros(((-rows) % 8, LANES), jnp.float32)
    return jnp.concatenate([oa_rows, mask_rows, bba_rows, tail], axis=0)


# ----------------------------------------------------------------------------
# Parameters (deterministic synthetic init; ff_dim=32, hidden_layers=3)
# Biases are stored as (1, F) rows for explicit sublane broadcast in-kernel.
# ----------------------------------------------------------------------------
def init_params(key):
    keys = jax.random.split(key, 16)

    def lin(k, fan_in, fan_out):
        kw, kb = jax.random.split(k)
        s = 1.0 / jnp.sqrt(jnp.float32(fan_in))
        return (jax.random.uniform(kw, (fan_in, fan_out), jnp.float32, -s, s),
                jax.random.uniform(kb, (1, fan_out), jnp.float32, -s, s))

    p = {}
    p["pre_bba"] = [lin(keys[0], 76, FF_DIM),
                    lin(keys[1], FF_DIM, FF_DIM),
                    lin(keys[2], FF_DIM, FF_DIM)]
    p["pre_oa"] = [lin(keys[3], OA_FEATS, FF_DIM),
                   lin(keys[4], FF_DIM, FF_DIM),
                   lin(keys[5], FF_DIM, FF_DIM)]
    p["hidden"] = [lin(keys[6], 4 * FF_DIM, FF_DIM),            # hidden_layers=3 -> 2 linears
                   lin(keys[7], FF_DIM, FF_DIM)]
    p["emb"] = lin(keys[8], FF_DIM, ACT_FEATURES)               # emb_convertor
    p["act_net"] = [lin(keys[9], 8, 256),
                    lin(keys[10], 256, 256),
                    lin(keys[11], 256, ACT_FEATURES)]
    p["actions"] = jax.random.uniform(keys[12], (N_ACTIONS, 8), jnp.float32, -1.0, 1.0)
    return p


def precompute_act_emb(params):
    # Constant action embeddings: compute once, off the hot path.
    (a0, d0), (a1, d1), (a2, d2) = params["act_net"]
    return _call(_act_net_kernel,
                 jax.ShapeDtypeStruct((N_ACTIONS, ACT_FEATURES), jnp.float32),
                 params["actions"], a0, d0, a1, d1, a2, d2)


def pack_params(params, act_emb):
    """One (592, 32) f32 slab holding all weights + biases at static offsets."""
    (wb0, bb0), (wb1, bb1), (wb2, bb2) = params["pre_bba"]
    (wo0, bo0), (wo1, bo1), (wo2, bo2) = params["pre_oa"]
    (wh0, bh0), (wh1, bh1) = params["hidden"]
    we, be = params["emb"]

    # Fold the constant action embeddings into the emb_convertor:
    #   (x @ we + be) @ act_emb.T  ==  x @ (we @ act_emb.T) + (be @ act_emb.T)
    wfold = jnp.pad(we @ act_emb.T, ((0, 0), (0, FF_DIM - N_ACTIONS)))
    bfold = jnp.pad(be @ act_emb.T, ((0, 0), (0, FF_DIM - N_ACTIONS)))

    def rpad(w, rows):
        return jnp.pad(w, ((0, rows - w.shape[0]), (0, 0)))

    mats = {"wb0": rpad(wb0, 128), "wb1": wb1, "wb2": wb2,
            "wo0": rpad(wo0, 128), "wo1": wo1, "wo2": wo2,
            "wh0": wh0, "wh1": wh1, "wfold": wfold}
    pieces = [mats[name] for name, _ in _W_LAYOUT]
    biases = [bb0, bb1, bb2, bo0, bo1, bo2, bh0, bh1, bfold]
    bias_block = jnp.concatenate(
        biases + [jnp.zeros((W_SLAB_ROWS - BIAS_ROW0 - len(biases), FF_DIM),
                            jnp.float32)], axis=0)
    return jnp.concatenate(pieces + [bias_block], axis=0)   # (592, 32)


# ----------------------------------------------------------------------------
# Forward (single fused Pallas call, 2 inputs) and pure-JAX reference
# ----------------------------------------------------------------------------
def bcnet_forward(params, inp):
    B = inp.shape[0]
    bba, oa_aug, nonzero = preprocess(inp)
    x_slab = pack_activations(bba, oa_aug, nonzero)
    return _call(_fused_forward_kernel,
                 jax.ShapeDtypeStruct((B, N_ACTIONS), jnp.float32),
                 x_slab, params["w_slab"])


def bcnet_forward_ref(params, inp):
    bba, oa_aug, nonzero = preprocess(inp)
    x = bba
    for w, b in params["pre_bba"]:
        x = jnp.maximum(x @ w + b, 0.0)
    x_bba = x
    h = oa_aug
    for w, b in params["pre_oa"]:
        h = jnp.maximum(h @ w + b, 0.0)
    mask = ~nonzero
    a = jnp.where(mask, jnp.inf, 0.0)[..., None]
    mn = jnp.min(h + a, axis=-2)
    mx = jnp.max(h - a, axis=-2)
    valid = (~mask).astype(jnp.float32)[..., None]
    mean = jnp.sum(h * valid, axis=-2) / jnp.sum(valid, axis=-2)
    x_oa = jnp.concatenate((mn, mx, mean), axis=-1)
    x = jnp.concatenate((x_bba, x_oa), axis=-1)
    for w, b in params["hidden"]:
        x = jnp.maximum(x @ w + b, 0.0)
    we, be = params["emb"]
    p = x @ we + be
    act = params["actions"]
    for i, (w, b) in enumerate(params["act_net"]):
        act = act @ w + b
        if i < 2:
            act = jnp.maximum(act, 0.0)
    return jnp.einsum("ad,bd->ba", act, p)


if __name__ == "__main__":
    key = jax.random.PRNGKey(0)
    kp, kx = jax.random.split(key)
    params = init_params(kp)
    # Hoist the constant action-embedding branch out of the forward path and
    # fold it (plus every other parameter) into a single DMA slab.
    act_emb = jax.block_until_ready(precompute_act_emb(params))
    params["w_slab"] = jax.block_until_ready(pack_params(params, act_emb))
    inp = jax.random.normal(kx, (BATCH, INPUT_DIM), dtype=jnp.float32)

    fwd = jax.jit(bcnet_forward)
    out = jax.block_until_ready(fwd(params, inp))
    ref = bcnet_forward_ref(params, inp)

    assert out.shape == (BATCH, N_ACTIONS), out.shape
    err = float(jnp.max(jnp.abs(out - ref)))
    assert jnp.allclose(out, ref, atol=1e-3, rtol=1e-3), err
    print("KERNEL_OK")
</pallas_src>

<mosaic_0001>
module attributes {stable_mosaic.version = 11 : i64} {
  func.func @_act_net_kernel(%arg0: memref<16x8xf32, #tpu.memory_space<vmem>>, %arg1: memref<8x256xf32, #tpu.memory_space<vmem>>, %arg2: memref<1x256xf32, #tpu.memory_space<vmem>>, %arg3: memref<256x256xf32, #tpu.memory_space<vmem>>, %arg4: memref<1x256xf32, #tpu.memory_space<vmem>>, %arg5: memref<256x32xf32, #tpu.memory_space<vmem>>, %arg6: memref<1x32xf32, #tpu.memory_space<vmem>>, %arg7: memref<16x32xf32, #tpu.memory_space<vmem>>) attributes {dimension_semantics = [], scalar_prefetch = 0 : i64, scratch_operands = 0 : i64, tpu.core_type = #tpu.core_type<tc>} {
    %c0 = arith.constant 0 : index
    %c0_0 = arith.constant 0 : index
    %0 = vector.load %arg0[%c0, %c0_0] : memref<16x8xf32, #tpu.memory_space<vmem>>, vector<16x8xf32>
    %c0_1 = arith.constant 0 : index
    %c0_2 = arith.constant 0 : index
    %1 = vector.load %arg1[%c0_1, %c0_2] : memref<8x256xf32, #tpu.memory_space<vmem>>, vector<8x256xf32>
    %cst = arith.constant dense<0.000000e+00> : vector<16x256xf32>
    %2 = tpu.matmul %0, %1, %cst {dimension_numbers = #tpu.dot_dimension_numbers<[1], [0], [0], [1], [0, 0, 1, 1], [], []>} : vector<16x8xf32>, vector<8x256xf32>, vector<16x256xf32> -> vector<16x256xf32>
    %c0_3 = arith.constant 0 : index
    %c0_4 = arith.constant 0 : index
    %3 = vector.load %arg2[%c0_3, %c0_4] : memref<1x256xf32, #tpu.memory_space<vmem>>, vector<1x256xf32>
    %4 = vector.broadcast %3 : vector<1x256xf32> to vector<16x256xf32>
    %5 = arith.addf %2, %4 : vector<16x256xf32>
    %cst_5 = arith.constant 0.000000e+00 : f32
    %6 = vector.broadcast %cst_5 : f32 to vector<16x256xf32>
    %7 = arith.maximumf %5, %6 : vector<16x256xf32>
    %c0_6 = arith.constant 0 : index
    %c0_7 = arith.constant 0 : index
    %8 = vector.load %arg3[%c0_6, %c0_7] : memref<256x256xf32, #tpu.memory_space<vmem>>, vector<256x256xf32>
    %cst_8 = arith.constant dense<0.000000e+00> : vector<16x256xf32>
    %9 = tpu.matmul %7, %8, %cst_8 {dimension_numbers = #tpu.dot_dimension_numbers<[1], [0], [0], [1], [0, 0, 1, 1], [], []>} : vector<16x256xf32>, vector<256x256xf32>, vector<16x256xf32> -> vector<16x256xf32>
    %c0_9 = arith.constant 0 : index
    %c0_10 = arith.constant 0 : index
    %10 = vector.load %arg4[%c0_9, %c0_10] : memref<1x256xf32, #tpu.memory_space<vmem>>, vector<1x256xf32>
    %11 = vector.broadcast %10 : vector<1x256xf32> to vector<16x256xf32>
    %12 = arith.addf %9, %11 : vector<16x256xf32>
    %cst_11 = arith.constant 0.000000e+00 : f32
    %13 = vector.broadcast %cst_11 : f32 to vector<16x256xf32>
    %14 = arith.maximumf %12, %13 : vector<16x256xf32>
    %c0_12 = arith.constant 0 : index
    %c0_13 = arith.constant 0 : index
    %15 = vector.load %arg5[%c0_12, %c0_13] : memref<256x32xf32, #tpu.memory_space<vmem>>, vector<256x32xf32>
    %cst_14 = arith.constant dense<0.000000e+00> : vector<16x32xf32>
    %16 = tpu.matmul %14, %15, %cst_14 {dimension_numbers = #tpu.dot_dimension_numbers<[1], [0], [0], [1], [0, 0, 1, 1], [], []>} : vector<16x256xf32>, vector<256x32xf32>, vector<16x32xf32> -> vector<16x32xf32>
    %c0_15 = arith.constant 0 : index
    %c0_16 = arith.constant 0 : index
    %17 = vector.load %arg6[%c0_15, %c0_16] : memref<1x32xf32, #tpu.memory_space<vmem>>, vector<1x32xf32>
    %18 = vector.broadcast %17 : vector<1x32xf32> to vector<16x32xf32>
    %19 = arith.addf %16, %18 : vector<16x32xf32>
    %c0_17 = arith.constant 0 : index
    %c0_18 = arith.constant 0 : index
    %20 = vector.load %arg7[%c0_17, %c0_18] : memref<16x32xf32, #tpu.memory_space<vmem>>, vector<16x32xf32>
    tpu.vector_store %arg7[%c0_17, %c0_18], %19 {strides = array<i32>} : memref<16x32xf32, #tpu.memory_space<vmem>>, vector<16x32xf32>,
    return
  }
}

</mosaic_0001>

<llo_original>
// kernel: tpu_custom_call.1
$region0: #{tpu_custom_call.1}
  #allocation0 [shape = 'u32[]', space=smem, size = 0x4, offset = 0x4, fixed_abs, tag = 'smem constant byte address 0x4 - core index']
  #allocation1 [shape = 'u32[144,128]{1,0:T(1,128)}', space=vmem, size = 0x12000, scoped, tag = 'internal scratch']
  %s0 = inlined_call_operand.vmem [shape: f32[16,8], index: 0, kind: input, shape index: {}]
  %s1 = inlined_call_operand.vmem [shape: f32[8,256], index: 1, kind: input, shape index: {}]
  %s2 = inlined_call_operand.vmem [shape: f32[1,256], index: 2, kind: input, shape index: {}]
  %s3 = inlined_call_operand.hbm [shape: f32[256,256], index: 3, kind: input, shape index: {}]
  %s4 = inlined_call_operand.vmem [shape: f32[1,256], index: 4, kind: input, shape index: {}]
  %s5 = inlined_call_operand.vmem [shape: f32[256,32], index: 5, kind: input, shape index: {}]
  %s6 = inlined_call_operand.vmem [shape: f32[1,32], index: 6, kind: input, shape index: {}]
  %s7 = inlined_call_operand.hbm [shape: f32[16,32], index: 7, kind: output, shape index: {}]
  %s8 = sld [smem:[#allocation0]]
  $region42: #{tpu_custom_call.1} parent=0
    _
  %s10 = ssub.s32 1, %s8
  %s11 = scalar_select 0, %s10, %s8
  $region1: #{tpu_custom_call.1} parent=0
    #allocation2 [shape = 'u8[262144]{0}', space=vmem, size = 0x40000, scoped, tag = 'input window, operand 3, single buffered']
    #allocation3 [shape = 's32[1]{0}', space=sflag, size = 0x4, scoped, tag = 'scoped memory for tpu_custom_call.1']
    #allocation4 [shape = 's32[1]{0}', space=sflag, size = 0x4, scoped, tag = 'scoped memory for tpu_custom_call.1']
    #allocation5 [shape = 'u8[8192]{0}', space=vmem, size = 0x2000, scoped, tag = 'output window, operand 0, single buffered']
    %12 = vsyncpa [#allocation3], 0
    %13 = vsyncpa [#allocation4], 0
    // Predicated region
    $region2: #{tpu_custom_call.1} parent=1 // pred_check
      _
    $region3: #{tpu_custom_call.1} parent=1 // pred_check_branch
      %15 = sbr.rel (0) target = $region5
    $region4: #{tpu_custom_call.1} parent=1 // pred_region
      _
    $region5: #{tpu_custom_call.1} parent=1 // pred_fallthru
      _
    // Predicated region
    $region6: #{tpu_custom_call.1} parent=1 // pred_check
      _
    $region7: #{tpu_custom_call.1} parent=1 // pred_check_branch
      %17 = sbr.rel (0) target = $region9
    $region8: #{tpu_custom_call.1} parent=1 // pred_region
      _
    $region9: #{tpu_custom_call.1} parent=1 // pred_fallthru
      _
    // Predicated region
    $region10: #{tpu_custom_call.1} parent=1 // pred_check
      _
    $region11: #{tpu_custom_call.1} parent=1 // pred_check_branch
      %19 = sbr.rel (0) target = $region13
    $region12: #{tpu_custom_call.1} parent=1 // pred_region
      _
    $region13: #{tpu_custom_call.1} parent=1 // pred_fallthru
      _
    // Predicated region
    $region14: #{tpu_custom_call.1} parent=1 // pred_check
      _
    $region15: #{tpu_custom_call.1} parent=1 // pred_check_branch
      %21 = sbr.rel (0) target = $region17
    $region16: #{tpu_custom_call.1} parent=1 // pred_region
      %s23 = ssub.s32 8192, 8192
      %24 = vsyncadd [#allocation3], %s23
      %s25 = sshll.u32 [#allocation2], 4
      %s26 = int_to_ptr.vmem [resolvable:$true] %s25
      %31 = dma.hbm_to_vmem [thread:$0]  %s3, 8192, %s26, [#allocation3], 256, 256, 16
    $region17: #{tpu_custom_call.1} parent=1 // pred_fallthru
      _
    // Predicated region
    $region18: #{tpu_custom_call.1} parent=1 // pred_check
      _
    $region19: #{tpu_custom_call.1} parent=1 // pred_check_branch
      %33 = sbr.rel (0) target = $region21
    $region20: #{tpu_custom_call.1} parent=1 // pred_region
      _
    $region21: #{tpu_custom_call.1} parent=1 // pred_fallthru
      _
    // Predicated region
    $region22: #{tpu_custom_call.1} parent=1 // pred_check
      _
    $region23: #{tpu_custom_call.1} parent=1 // pred_check_branch
      %35 = sbr.rel (0) target = $region25
    $region24: #{tpu_custom_call.1} parent=1 // pred_region
      _
    $region25: #{tpu_custom_call.1} parent=1 // pred_fallthru
      _
    // Predicated region
    $region26: #{tpu_custom_call.1} parent=1 // pred_check
      _
    $region27: #{tpu_custom_call.1} parent=1 // pred_check_branch
      %37 = sbr.rel (0) target = $region29
    $region28: #{tpu_custom_call.1} parent=1 // pred_region
      _
    $region29: #{tpu_custom_call.1} parent=1 // pred_fallthru
      _
    // Predicated region
    $region30: #{tpu_custom_call.1} parent=1 // pred_check
      _
    $region31: #{tpu_custom_call.1} parent=1 // pred_check_branch
      %39 = sbr.rel (0) target = $region33
    $region32: #{tpu_custom_call.1} parent=1 // pred_region
      %40 = dma.done [#allocation3], 8192
    $region33: #{tpu_custom_call.1} parent=1 // pred_fallthru
      _
    %v41 = vld [vmem:[%s0] sm:$0xff]
    %v42 = vld [vmem:[%s0 + $0x8] sm:$0xff]
    %v43 = vld [vmem:[%s1] sm:$0xff]
    %v44 = vld [vmem:[%s1 + $0x8] sm:$0xff]
    %v45 = vld [vmem:[%s2] sm:$0x3]
    %v47 = vlaneseq
    %v48 = vshrl.u32 %v47, 7
    %v49 = vsub.s32 0, %v48
    %v50 = vrot.slane %v45, %v49
    %v51 = vlaneseq
    %v52 = vshrl.u32 %v51, 7
    %v53 = vsub.s32 1, %v52
    %v54 = vrot.slane %v45, %v53
    %vm57 = vcmask 64512
    %v59 = vsel %vm57, %v41, 0
    %v62 = vsel %vm57, %v42, 0
    %64 = vmatprep.subr.mxu0 %v44
    %65 = vmatpush1.msra.mxu0 %v43
    %66 = vmatprep.subr.mxu0 0.0
    %67 = vmatpush1.msra.mxu0 0.0
    %68 = vmatprep.subr.mxu0 0.0
    %69 = vmatpush1.msra.mxu0 0.0
    %70 = vmatprep.subr.mxu0 0.0
    %71 = vmatpush1.msra.mxu0 0.0
    %72 = vmatprep.subr.mxu0 0.0
    %73 = vmatpush1.msra.mxu0 0.0
    %74 = vmatprep.subr.mxu0 0.0
    %75 = vmatpush1.msra.mxu0 0.0
    %76 = vmatprep.subr.mxu0 0.0
    %77 = vmatpush1.msra.mxu0 0.0
    %78 = vmatprep.subr.mxu0 0.0
    %79 = vmatpush1.msra.mxu0 0.0
    %80 = vmatprep.subr.mxu0 0.0
    %81 = vmatpush1.msra.mxu0 0.0
    %82 = vmatprep.subr.mxu0 0.0
    %83 = vmatpush1.msra.mxu0 0.0
    %84 = vmatprep.subr.mxu0 0.0
    %85 = vmatpush1.msra.mxu0 0.0
    %86 = vmatprep.subr.mxu0 0.0
    %87 = vmatpush1.msra.mxu0 0.0
    %88 = vmatprep.subr.mxu0 0.0
    %89 = vmatpush1.msra.mxu0 0.0
    %90 = vmatprep.subr.mxu0 0.0
    %91 = vmatpush1.msra.mxu0 0.0
    %92 = vmatprep.subr.mxu0 0.0
    %93 = vmatpush1.msra.mxu0 0.0
    %94 = vmatprep.subr.mxu0 0.0
    %95 = vmatpush1.msra.mxu0 0.0
    %96 = vmatprep.subr.mxu0 0.0
    %97 = vmatpush1.msra.mxu0 0.0
    %98 = vmatprep.subr.mxu0 0.0
    %99 = vmatpush1.msra.mxu0 0.0
    %100 = vmatprep.subr.mxu0 0.0
    %101 = vmatpush1.msra.mxu0 0.0
    %102 = vmatprep.subr.mxu0 0.0
    %103 = vmatpush1.msra.mxu0 0.0
    %104 = vmatprep.subr.mxu0 0.0
    %105 = vmatpush1.msra.mxu0 0.0
    %106 = vmatprep.subr.mxu0 0.0
    %107 = vmatpush1.msra.mxu0 0.0
    %108 = vmatprep.subr.mxu0 0.0
    %109 = vmatpush1.msra.mxu0 0.0
    %110 = vmatprep.subr.mxu0 0.0
    %111 = vmatpush1.msra.mxu0 0.0
    %112 = vmatprep.subr.mxu0 0.0
    %113 = vmatpush1.msra.mxu0 0.0
    %114 = vmatprep.subr.mxu0 0.0
    %115 = vmatpush1.msra.mxu0 0.0
    %116 = vmatprep.subr.mxu0 0.0
    %117 = vmatpush1.msra.mxu0 0.0
    %118 = vmatprep.subr.mxu0 0.0
    %119 = vmatpush1.msra.mxu0 0.0
    %120 = vmatprep.subr.mxu0 0.0
    %121 = vmatpush1.msra.mxu0 0.0
    %122 = vmatprep.subr.mxu0 0.0
    %123 = vmatpush1.msra.mxu0 0.0
    %124 = vmatprep.subr.mxu0 0.0
    %125 = vmatpush1.msra.mxu0 0.0
    %126 = vmatprep.subr.mxu0 0.0
    %127 = vmatpush1.msra.mxu0 0.0
    %128 = vmatprep.mubr.f32.mxu0 0.0
    %129 = vmatmul.mubr.f32.gmra.mrb[0].mxu0 %v59
    %v130 = vpop.f32.mrb[0].mxu0
    %v131 = vadd.f32 %v50, %v130
    %v132 = vpop.f32.mrb[0].mxu0
    %v133 = vadd.f32 %v54, %v132
    %134 = vmatprep.mubr.f32.mxu0 0.0
    %135 = vmatmul.mubr.f32.gmra.mrb[0].mxu0 %v62
    %v136 = vpop.f32.mrb[0].mxu0
    %v137 = vadd.f32 %v50, %v136
    %v138 = vpop.f32.mrb[0].mxu0
    %v139 = vadd.f32 %v54, %v138
    %140 = vdwg.mxu0
    %v141 = vmax.f32 %v131, 0.0
    %v142 = vmax.f32 %v133, 0.0
    %v143 = vmax.f32 %v137, 0.0
    %v144 = vmax.f32 %v139, 0.0
    %v145 = vld [vmem:[#allocation2] sm:$0xff]
    %v146 = vld [vmem:[#allocation2 + $0x8] sm:$0xff]
    %v147 = vld [vmem:[#allocation2 + $0x10] sm:$0xff]
    %v148 = vld [vmem:[#allocation2 + $0x18] sm:$0xff]
    %v149 = vld [vmem:[#allocation2 + $0x20] sm:$0xff]
    %v150 = vld [vmem:[#allocation2 + $0x28] sm:$0xff]
    %v151 = vld [vmem:[#allocation2 + $0x30] sm:$0xff]
    %v152 = vld [vmem:[#allocation2 + $0x38] sm:$0xff]
    %v153 = vld [vmem:[#allocation2 + $0x40] sm:$0xff]
    %v154 = vld [vmem:[#allocation2 + $0x48] sm:$0xff]
    %v155 = vld [vmem:[#allocation2 + $0x50] sm:$0xff]
    %v156 = vld [vmem:[#allocation2 + $0x58] sm:$0xff]
    %v157 = vld [vmem:[#allocation2 + $0x60] sm:$0xff]
    %v158 = vld [vmem:[#allocation2 + $0x68] sm:$0xff]
    %v159 = vld [vmem:[#allocation2 + $0x70] sm:$0xff]
    %v160 = vld [vmem:[#allocation2 + $0x78] sm:$0xff]
    %v161 = vld [vmem:[#allocation2 + $0x80] sm:$0xff]
    %v162 = vld [vmem:[#allocation2 + $0x88] sm:$0xff]
    %v163 = vld [vmem:[#allocation2 + $0x90] sm:$0xff]
    %v164 = vld [vmem:[#allocation2 + $0x98] sm:$0xff]
    %v165 = vld [vmem:[#allocation2 + $0xa0] sm:$0xff]
    %v166 = vld [vmem:[#allocation2 + $0xa8] sm:$0xff]
    %v167 = vld [vmem:[#allocation2 + $0xb0] sm:$0xff]
    %v168 = vld [vmem:[#allocation2 + $0xb8] sm:$0xff]
    %v169 = vld [vmem:[#allocation2 + $0xc0] sm:$0xff]
    %v170 = vld [vmem:[#allocation2 + $0xc8] sm:$0xff]
    %v171 = vld [vmem:[#allocation2 + $0xd0] sm:$0xff]
    %v172 = vld [vmem:[#allocation2 + $0xd8] sm:$0xff]
    %v173 = vld [vmem:[#allocation2 + $0xe0] sm:$0xff]
    %v174 = vld [vmem:[#allocation2 + $0xe8] sm:$0xff]
    %v175 = vld [vmem:[#allocation2 + $0xf0] sm:$0xff]
    %v176 = vld [vmem:[#allocation2 + $0xf8] sm:$0xff]
    %v177 = vld [vmem:[#allocation2 + $0x100] sm:$0xff]
    %v178 = vld [vmem:[#allocation2 + $0x108] sm:$0xff]
    %v179 = vld [vmem:[#allocation2 + $0x110] sm:$0xff]
    %v180 = vld [vmem:[#allocation2 + $0x118] sm:$0xff]
    %v181 = vld [vmem:[#allocation2 + $0x120] sm:$0xff]
    %v182 = vld [vmem:[#allocation2 + $0x128] sm:$0xff]
    %v183 = vld [vmem:[#allocation2 + $0x130] sm:$0xff]
    %v184 = vld [vmem:[#allocation2 + $0x138] sm:$0xff]
    %v185 = vld [vmem:[#allocation2 + $0x140] sm:$0xff]
    %v186 = vld [vmem:[#allocation2 + $0x148] sm:$0xff]
    %v187 = vld [vmem:[#allocation2 + $0x150] sm:$0xff]
    %v188 = vld [vmem:[#allocation2 + $0x158] sm:$0xff]
    %v189 = vld [vmem:[#allocation2 + $0x160] sm:$0xff]
    %v190 = vld [vmem:[#allocation2 + $0x168] sm:$0xff]
    %v191 = vld [vmem:[#allocation2 + $0x170] sm:$0xff]
    %v192 = vld [vmem:[#allocation2 + $0x178] sm:$0xff]
    %v193 = vld [vmem:[#allocation2 + $0x180] sm:$0xff]
    %v194 = vld [vmem:[#allocation2 + $0x188] sm:$0xff]
    %v195 = vld [vmem:[#allocation2 + $0x190] sm:$0xff]
    %v196 = vld [vmem:[#allocation2 + $0x198] sm:$0xff]
    %v197 = vld [vmem:[#allocation2 + $0x1a0] sm:$0xff]
    %v198 = vld [vmem:[#allocation2 + $0x1a8] sm:$0xff]
    %v199 = vld [vmem:[#allocation2 + $0x1b0] sm:$0xff]
    %v200 = vld [vmem:[#allocation2 + $0x1b8] sm:$0xff]
    %v201 = vld [vmem:[#allocation2 + $0x1c0] sm:$0xff]
    %v202 = vld [vmem:[#allocation2 + $0x1c8] sm:$0xff]
    %v203 = vld [vmem:[#allocation2 + $0x1d0] sm:$0xff]
    %v204 = vld [vmem:[#allocation2 + $0x1d8] sm:$0xff]
    %v205 = vld [vmem:[#allocation2 + $0x1e0] sm:$0xff]
    %v206 = vld [vmem:[#allocation2 + $0x1e8] sm:$0xff]
    %v207 = vld [vmem:[#allocation2 + $0x1f0] sm:$0xff]
    %v208 = vld [vmem:[#allocation2 + $0x1f8] sm:$0xff]
    %v209 = vld [vmem:[%s4] sm:$0x3]
    %v211 = vlaneseq
    %v212 = vshrl.u32 %v211, 7
    %v213 = vsub.s32 0, %v212
    %v214 = vrot.slane %v209, %v213
    %v215 = vlaneseq
    %v216 = vshrl.u32 %v215, 7
    %v217 = vsub.s32 1, %v216
    %v218 = vrot.slane %v209, %v217
    %221 = vmatprep.subr.mxu0 %v146
    %222 = vmatpush1.msra.mxu0 %v145
    %223 = vmatprep.subr.mxu0 %v148
    %224 = vmatpush1.msra.mxu0 %v147
    %225 = vmatprep.subr.mxu0 %v150
    %226 = vmatpush1.msra.mxu0 %v149
    %227 = vmatprep.subr.mxu0 %v152
    %228 = vmatpush1.msra.mxu0 %v151
    %229 = vmatprep.subr.mxu0 %v154
    %230 = vmatpush1.msra.mxu0 %v153
    %231 = vmatprep.subr.mxu0 %v156
    %232 = vmatpush1.msra.mxu0 %v155
    %233 = vmatprep.subr.mxu0 %v158
    %234 = vmatpush1.msra.mxu0 %v157
    %235 = vmatprep.subr.mxu0 %v160
    %236 = vmatpush1.msra.mxu0 %v159
    %237 = vmatprep.subr.mxu0 %v162
    %238 = vmatpush1.msra.mxu0 %v161
    %239 = vmatprep.subr.mxu0 %v164
    %240 = vmatpush1.msra.mxu0 %v163
    %241 = vmatprep.subr.mxu0 %v166
    %242 = vmatpush1.msra.mxu0 %v165
    %243 = vmatprep.subr.mxu0 %v168
    %244 = vmatpush1.msra.mxu0 %v167
    %245 = vmatprep.subr.mxu0 %v170
    %246 = vmatpush1.msra.mxu0 %v169
    %247 = vmatprep.subr.mxu0 %v172
    %248 = vmatpush1.msra.mxu0 %v171
    %249 = vmatprep.subr.mxu0 %v174
    %250 = vmatpush1.msra.mxu0 %v173
    %251 = vmatprep.subr.mxu0 %v176
    %252 = vmatpush1.msra.mxu0 %v175
    %253 = vmatprep.subr.mxu0 %v178
    %254 = vmatpush1.msra.mxu0 %v177
    %255 = vmatprep.subr.mxu0 %v180
    %256 = vmatpush1.msra.mxu0 %v179
    %257 = vmatprep.subr.mxu0 %v182
    %258 = vmatpush1.msra.mxu0 %v181
    %259 = vmatprep.subr.mxu0 %v184
    %260 = vmatpush1.msra.mxu0 %v183
    %261 = vmatprep.subr.mxu0 %v186
    %262 = vmatpush1.msra.mxu0 %v185
    %263 = vmatprep.subr.mxu0 %v188
    %264 = vmatpush1.msra.mxu0 %v187
    %265 = vmatprep.subr.mxu0 %v190
    %266 = vmatpush1.msra.mxu0 %v189
    %267 = vmatprep.subr.mxu0 %v192
    %268 = vmatpush1.msra.mxu0 %v191
    %269 = vmatprep.subr.mxu0 %v194
    %270 = vmatpush1.msra.mxu0 %v193
    %271 = vmatprep.subr.mxu0 %v196
    %272 = vmatpush1.msra.mxu0 %v195
    %273 = vmatprep.subr.mxu0 %v198
    %274 = vmatpush1.msra.mxu0 %v197
    %275 = vmatprep.subr.mxu0 %v200
    %276 = vmatpush1.msra.mxu0 %v199
    %277 = vmatprep.subr.mxu0 %v202
    %278 = vmatpush1.msra.mxu0 %v201
    %279 = vmatprep.subr.mxu0 %v204
    %280 = vmatpush1.msra.mxu0 %v203
    %281 = vmatprep.subr.mxu0 %v206
    %282 = vmatpush1.msra.mxu0 %v205
    %283 = vmatprep.subr.mxu0 %v208
    %284 = vmatpush1.msra.mxu0 %v207
    %285 = vmatprep.mubr.f32.mxu0 %v142
    %286 = vmatmul.mubr.f32.gmra.mrb[0].mxu0 %v141
    %v287 = vpop.f32.mrb[0].mxu0
    %v288 = vadd.f32 %v214, %v287
    %v289 = vpop.f32.mrb[0].mxu0
    %v290 = vadd.f32 %v218, %v289
    %291 = vmatprep.mubr.f32.mxu0 %v144
    %292 = vmatmul.mubr.f32.gmra.mrb[0].mxu0 %v143
    %v293 = vpop.f32.mrb[0].mxu0
    %v294 = vadd.f32 %v214, %v293
    %v295 = vpop.f32.mrb[0].mxu0
    %v296 = vadd.f32 %v218, %v295
    %297 = vdwg.mxu0
    %v298 = vmax.f32 %v288, 0.0
    %v299 = vmax.f32 %v290, 0.0
    %v300 = vmax.f32 %v294, 0.0
    %v301 = vmax.f32 %v296, 0.0
    %v302 = vld [vmem:[%s5] sm:$0xff]
    %v303 = vld [vmem:[%s5 + $0x8] sm:$0xff]
    %v304 = vld [vmem:[%s5 + $0x10] sm:$0xff]
    %v305 = vld [vmem:[%s5 + $0x18] sm:$0xff]
    %v306 = vld [vmem:[%s5 + $0x20] sm:$0xff]
    %v307 = vld [vmem:[%s5 + $0x28] sm:$0xff]
    %v308 = vld [vmem:[%s5 + $0x30] sm:$0xff]
    %v309 = vld [vmem:[%s5 + $0x38] sm:$0xff]
    %v310 = vld [vmem:[%s5 + $0x40] sm:$0xff]
    %v311 = vld [vmem:[%s5 + $0x48] sm:$0xff]
    %v312 = vld [vmem:[%s5 + $0x50] sm:$0xff]
    %v313 = vld [vmem:[%s5 + $0x58] sm:$0xff]
    %v314 = vld [vmem:[%s5 + $0x60] sm:$0xff]
    %v315 = vld [vmem:[%s5 + $0x68] sm:$0xff]
    %v316 = vld [vmem:[%s5 + $0x70] sm:$0xff]
    %v317 = vld [vmem:[%s5 + $0x78] sm:$0xff]
    %v318 = vld [vmem:[%s5 + $0x80] sm:$0xff]
    %v319 = vld [vmem:[%s5 + $0x88] sm:$0xff]
    %v320 = vld [vmem:[%s5 + $0x90] sm:$0xff]
    %v321 = vld [vmem:[%s5 + $0x98] sm:$0xff]
    %v322 = vld [vmem:[%s5 + $0xa0] sm:$0xff]
    %v323 = vld [vmem:[%s5 + $0xa8] sm:$0xff]
    %v324 = vld [vmem:[%s5 + $0xb0] sm:$0xff]
    %v325 = vld [vmem:[%s5 + $0xb8] sm:$0xff]
    %v326 = vld [vmem:[%s5 + $0xc0] sm:$0xff]
    %v327 = vld [vmem:[%s5 + $0xc8] sm:$0xff]
    %v328 = vld [vmem:[%s5 + $0xd0] sm:$0xff]
    %v329 = vld [vmem:[%s5 + $0xd8] sm:$0xff]
    %v330 = vld [vmem:[%s5 + $0xe0] sm:$0xff]
    %v331 = vld [vmem:[%s5 + $0xe8] sm:$0xff]
    %v332 = vld [vmem:[%s5 + $0xf0] sm:$0xff]
    %v333 = vld [vmem:[%s5 + $0xf8] sm:$0xff]
    %v334 = vld [vmem:[%s6] sm:$0x1]
    %v336 = vlaneseq
    %v337 = vshrl.u32 %v336, 7
    %v338 = vsub.s32 0, %v337
    %v339 = vrot.slane %v334, %v338
    %341 = vmatprep.subr.mxu0 0.0
    %342 = vmatpush1.msra.mxu0 %v302
    %343 = vmatprep.subr.mxu0 0.0
    %344 = vmatpush1.msra.mxu0 %v303
    %345 = vmatprep.subr.mxu0 0.0
    %346 = vmatpush1.msra.mxu0 %v304
    %347 = vmatprep.subr.mxu0 0.0
    %348 = vmatpush1.msra.mxu0 %v305
    %349 = vmatprep.subr.mxu0 0.0
    %350 = vmatpush1.msra.mxu0 %v306
    %351 = vmatprep.subr.mxu0 0.0
    %352 = vmatpush1.msra.mxu0 %v307
    %353 = vmatprep.subr.mxu0 0.0
    %354 = vmatpush1.msra.mxu0 %v308
    %355 = vmatprep.subr.mxu0 0.0
    %356 = vmatpush1.msra.mxu0 %v309
    %357 = vmatprep.subr.mxu0 0.0
    %358 = vmatpush1.msra.mxu0 %v310
    %359 = vmatprep.subr.mxu0 0.0
    %360 = vmatpush1.msra.mxu0 %v311
    %361 = vmatprep.subr.mxu0 0.0
    %362 = vmatpush1.msra.mxu0 %v312
    %363 = vmatprep.subr.mxu0 0.0
    %364 = vmatpush1.msra.mxu0 %v313
    %365 = vmatprep.subr.mxu0 0.0
    %366 = vmatpush1.msra.mxu0 %v314
    %367 = vmatprep.subr.mxu0 0.0
    %368 = vmatpush1.msra.mxu0 %v315
    %369 = vmatprep.subr.mxu0 0.0
    %370 = vmatpush1.msra.mxu0 %v316
    %371 = vmatprep.subr.mxu0 0.0
    %372 = vmatpush1.msra.mxu0 %v317
    %373 = vmatprep.subr.mxu0 0.0
    %374 = vmatpush1.msra.mxu0 %v318
    %375 = vmatprep.subr.mxu0 0.0
    %376 = vmatpush1.msra.mxu0 %v319
    %377 = vmatprep.subr.mxu0 0.0
    %378 = vmatpush1.msra.mxu0 %v320
    %379 = vmatprep.subr.mxu0 0.0
    %380 = vmatpush1.msra.mxu0 %v321
    %381 = vmatprep.subr.mxu0 0.0
    %382 = vmatpush1.msra.mxu0 %v322
    %383 = vmatprep.subr.mxu0 0.0
    %384 = vmatpush1.msra.mxu0 %v323
    %385 = vmatprep.subr.mxu0 0.0
    %386 = vmatpush1.msra.mxu0 %v324
    %387 = vmatprep.subr.mxu0 0.0
    %388 = vmatpush1.msra.mxu0 %v325
    %389 = vmatprep.subr.mxu0 0.0
    %390 = vmatpush1.msra.mxu0 %v326
    %391 = vmatprep.subr.mxu0 0.0
    %392 = vmatpush1.msra.mxu0 %v327
    %393 = vmatprep.subr.mxu0 0.0
    %394 = vmatpush1.msra.mxu0 %v328
    %395 = vmatprep.subr.mxu0 0.0
    %396 = vmatpush1.msra.mxu0 %v329
    %397 = vmatprep.subr.mxu0 0.0
    %398 = vmatpush1.msra.mxu0 %v330
    %399 = vmatprep.subr.mxu0 0.0
    %400 = vmatpush1.msra.mxu0 %v331
    %401 = vmatprep.subr.mxu0 0.0
    %402 = vmatpush1.msra.mxu0 %v332
    %403 = vmatprep.subr.mxu0 0.0
    %404 = vmatpush1.msra.mxu0 %v333
    %405 = vmatprep.mubr.f32.mxu0 %v299
    %406 = vmatmul.mubr.f32.gmra.mrb[0].mxu0 %v298
    %v407 = vpop.f32.mrb[0].mxu0
    %v408 = vadd.f32 %v339, %v407
    %v409 = vpop.f32.mrb[0].mxu0
    %410 = vmatprep.mubr.f32.mxu0 %v301
    %411 = vmatmul.mubr.f32.gmra.mrb[0].mxu0 %v300
    %v412 = vpop.f32.mrb[0].mxu0
    %v413 = vadd.f32 %v339, %v412
    %v414 = vpop.f32.mrb[0].mxu0
    %415 = vdwg.mxu0
    %vm416 = vcmask 261120
    %417 = vst.msk [vmem:[#allocation5] sm:$0xff] %vm416, %v408
    %418 = vst.msk [vmem:[#allocation5 + $0x8] sm:$0xff] %vm416, %v413
    // Predicated region
    $region34: #{tpu_custom_call.1} parent=1 // pred_check
      _
    $region35: #{tpu_custom_call.1} parent=1 // pred_check_branch
      %420 = sbr.rel (0) target = $region37
    $region36: #{tpu_custom_call.1} parent=1 // pred_region
      %s422 = ssub.s32 256, 256
      %423 = vsyncadd [#allocation4], %s422
      %s424 = sshll.u32 [#allocation5], 4
      %s425 = int_to_ptr.vmem [resolvable:$true] %s424
      %430 = dma.vmem_to_hbm [thread:$0]  %s425, 256, %s7, [#allocation4], 128, 128, 8
    $region37: #{tpu_custom_call.1} parent=1 // pred_fallthru
      _
    // Predicated region
    $region38: #{tpu_custom_call.1} parent=1 // pred_check
      _
    $region39: #{tpu_custom_call.1} parent=1 // pred_check_branch
      %432 = sbr.rel (0) target = $region41
    $region40: #{tpu_custom_call.1} parent=1 // pred_region
      %433 = dma.done [#allocation4], 256
    $region41: #{tpu_custom_call.1} parent=1 // pred_fallthru
      _
    %434 = vsyncpa [#allocation3], 1
    %435 = vsyncpa [#allocation4], 1

</llo_original>
